<compile_context>
chip_gen: v5e
topology: v5e:2x2
jax: 0.10.0
libtpu: 0.0.40
codegen_flags: <defaults>
</compile_context>

<pallas_src>
import functools

import jax
import jax.numpy as jnp
from jax import lax
from jax.experimental import pallas as pl
from jax.experimental.pallas import tpu as pltpu


def _round_up(x, m):
    return ((x + m - 1) // m) * m


def _proj_logsoftmax_kernel(x_ref, w_ref, b_ref, o_ref, m_sc, l_sc, *, mxu_dtype):
    # x_ref: (tm, D)   w_ref: (tv, D)   b_ref: (1, tv)   o_ref: (tm, tv)
    # m_sc/l_sc: (tm, 1) f32 scratch, persistent across the V / pass axes.
    p = pl.program_id(1)   # 0 = logsumexp pass, 1 = write pass
    vj = pl.program_id(2)

    @pl.when((p == 0) & (vj == 0))
    def _init():
        m_sc[...] = jnp.full_like(m_sc, -jnp.inf)
        l_sc[...] = jnp.zeros_like(l_sc)

    # MXU in bf16 (full rate on v5e/v6e/v7x), f32 accumulation.
    x_mx = x_ref[...].astype(mxu_dtype)
    w_mx = w_ref[...].astype(mxu_dtype)
    logits = lax.dot_general(
        x_mx, w_mx,
        dimension_numbers=(((1,), (1,)), ((), ())),   # contract d_model of both -> (tm, tv)
        preferred_element_type=jnp.float32,
    )
    logits = logits + b_ref[...]   # (1, tv) broadcast over rows, f32

    @pl.when(p == 0)
    def _accumulate():
        m_prev = m_sc[...]
        m_new = jnp.maximum(m_prev, jnp.max(logits, axis=-1, keepdims=True))
        l_sc[...] = (l_sc[...] * jnp.exp(m_prev - m_new)
                     + jnp.sum(jnp.exp(logits - m_new), axis=-1, keepdims=True))
        m_sc[...] = m_new
        # Placeholder store (overwritten in pass 1) so pass-0 writebacks are deterministic.
        o_ref[...] = logits.astype(o_ref.dtype)

    @pl.when(p == 1)
    def _finalize():
        lse = m_sc[...] + jnp.log(l_sc[...])
        o_ref[...] = (logits - lse).astype(o_ref.dtype)


@functools.partial(jax.jit, static_argnames=("tile_m", "tile_v"))
def projection_layer(x, weight, bias, *, tile_m=128, tile_v=512):
    """x: (..., d_model); weight: (vocab, d_model) as in nn.Linear; bias: (vocab,)."""
    d_model = x.shape[-1]
    vocab = weight.shape[0]
    lead_shape = x.shape[:-1]

    x2 = x.reshape(-1, d_model)
    M = x2.shape[0]

    # Effective tiles: shrink for tiny problems but keep TPU (8, 128) alignment.
    tm = min(tile_m, _round_up(M, 8))
    tv = min(tile_v, _round_up(vocab, 128))
    m_pad = _round_up(M, tm)
    v_pad = _round_up(vocab, tv)

    if m_pad != M:
        x2 = jnp.pad(x2, ((0, m_pad - M), (0, 0)))
    w = weight
    b = bias
    if v_pad != vocab:
        # Zero weight columns + very negative bias -> padded vocab entries vanish from the
        # logsumexp and never become the row max.
        w = jnp.pad(w, ((0, v_pad - vocab), (0, 0)))
        b = jnp.pad(b, ((0, v_pad - vocab),), constant_values=-1e30)
    b2 = b.reshape(1, v_pad).astype(jnp.float32)

    n_m = m_pad // tm
    n_v = v_pad // tv
    grid = (n_m, 2, n_v)   # rows (parallel), pass (arbitrary), vocab tiles (arbitrary)

    out_dtype = x.dtype
    out_bytes = jnp.dtype(out_dtype).itemsize
    in_bytes = jnp.dtype(x.dtype).itemsize
    w_bytes = jnp.dtype(weight.dtype).itemsize

    # VMEM budget for this tile plan (double-buffered in/out blocks + scratch) + headroom.
    est = 2 * (tm * d_model * in_bytes
               + tv * d_model * w_bytes
               + tv * 4
               + tm * tv * out_bytes) + 2 * tm * 4
    vmem_limit = int(min(max(2 * est + (2 << 20), 8 << 20), 64 << 20))

    cost = pl.CostEstimate(
        flops=4 * m_pad * d_model * v_pad,          # two matmul passes
        transcendentals=m_pad * v_pad,              # one exp per logit (pass 0)
        bytes_accessed=(m_pad * d_model * in_bytes
                        + 2 * v_pad * d_model * w_bytes   # weight streamed twice
                        + v_pad * 4
                        + 2 * m_pad * v_pad * out_bytes),
    )

    kernel = functools.partial(_proj_logsoftmax_kernel, mxu_dtype=jnp.bfloat16)

    out = pl.pallas_call(
        kernel,
        out_shape=jax.ShapeDtypeStruct((m_pad, v_pad), out_dtype),
        grid_spec=pltpu.PrefetchScalarGridSpec(
            num_scalar_prefetch=0,
            grid=grid,
            in_specs=[
                # x tile: constant along pass / vocab axes (stays resident).
                pl.BlockSpec((tm, d_model), lambda i, p, vj: (i, 0)),
                # weight tile in native (vocab, d_model) layout -> no wrapper transpose.
                pl.BlockSpec((tv, d_model), lambda i, p, vj: (vj, 0)),
                pl.BlockSpec((1, tv), lambda i, p, vj: (0, vj)),
            ],
            out_specs=pl.BlockSpec((tm, tv), lambda i, p, vj: (i, vj)),
            scratch_shapes=[
                pltpu.VMEM((tm, 1), jnp.float32),   # running max m
                pltpu.VMEM((tm, 1), jnp.float32),   # running sum l
            ],
        ),
        compiler_params=pltpu.CompilerParams(
            dimension_semantics=("parallel", "arbitrary", "arbitrary"),
            vmem_limit_bytes=vmem_limit,
        ),
        cost_estimate=cost,
    )(x2, w, b2)

    return out[:M, :vocab].reshape(*lead_shape, vocab)


if __name__ == "__main__":
    # Small shapes implied by the module: (batch, seq, d_model) -> (batch, seq, vocab)
    batch, seq, d_model, vocab = 2, 8, 32, 128

    key = jax.random.PRNGKey(0)
    kx, kw, kb = jax.random.split(key, 3)

    # Deterministic parameter init mimicking nn.Linear's uniform(-1/sqrt(fan_in), +)
    bound = 1.0 / (d_model ** 0.5)
    weight = jax.random.uniform(kw, (vocab, d_model), jnp.float32, -bound, bound)
    bias = jax.random.uniform(kb, (vocab,), jnp.float32, -bound, bound)
    x = jax.random.normal(kx, (batch, seq, d_model), jnp.float32)

    y = projection_layer(x, weight, bias)
    jax.block_until_ready(y)

    # Reference: torch.log_softmax(self.proj(x), dim=-1) in plain JAX (f32 matmul).
    ref = jax.nn.log_softmax(x @ weight.T + bias, axis=-1)
    assert y.shape == (batch, seq, vocab)
    # Kernel uses bf16 MXU operands (f32 accumulation) -> allow a small tolerance vs f32 ref.
    max_err = float(jnp.max(jnp.abs(y - ref)))
    assert jnp.allclose(y, ref, atol=3e-2, rtol=3e-2), f"max abs err {max_err}"

    print("KERNEL_OK")
</pallas_src>

<mosaic_0001>
module attributes {stable_mosaic.version = 11 : i64} {
  func.func @_proj_logsoftmax_kernel(%arg0: i32, %arg1: i32, %arg2: i32, %arg3: memref<16x32xf32, #tpu.memory_space<vmem>>, %arg4: memref<128x32xf32, #tpu.memory_space<vmem>>, %arg5: memref<1x128xf32, #tpu.memory_space<vmem>>, %arg6: memref<16x128xf32, #tpu.memory_space<vmem>>, %arg7: memref<16x1xf32, #tpu.memory_space<vmem>>, %arg8: memref<16x1xf32, #tpu.memory_space<vmem>>) attributes {dimension_semantics = [#tpu.dimension_semantics<parallel>, #tpu.dimension_semantics<arbitrary>, #tpu.dimension_semantics<arbitrary>], iteration_bounds = array<i64: 1, 2, 1>, scalar_prefetch = 0 : i64, scratch_operands = 2 : i64, tpu.core_type = #tpu.core_type<tc>, window_params = [{transform_indices = @transform_0, window_bounds = array<i64: 16, 32>}, {transform_indices = @transform_1, window_bounds = array<i64: 128, 32>}, {transform_indices = @transform_2, window_bounds = array<i64: 1, 128>}, {transform_indices = @transform_3, window_bounds = array<i64: 16, 128>}]} {
    %c0_i32 = arith.constant 0 : i32
    %0 = arith.cmpi eq, %arg1, %c0_i32 : i32
    %c0_i32_0 = arith.constant 0 : i32
    %1 = arith.cmpi eq, %arg2, %c0_i32_0 : i32
    %2 = arith.andi %0, %1 : i1
    %3 = arith.extui %2 : i1 to i32
    %c0_i32_1 = arith.constant 0 : i32
    %4 = arith.cmpi ne, %3, %c0_i32_1 : i32
    scf.if %4 {
      %cst_10 = arith.constant 0xFF800000 : f32
      %19 = vector.broadcast %cst_10 : f32 to vector<16x1xf32>
      %c0_11 = arith.constant 0 : index
      %c0_12 = arith.constant 0 : index
      %20 = vector.load %arg7[%c0_11, %c0_12] : memref<16x1xf32, #tpu.memory_space<vmem>>, vector<16x1xf32>
      tpu.vector_store %arg7[%c0_11, %c0_12], %19 {strides = array<i32>} : memref<16x1xf32, #tpu.memory_space<vmem>>, vector<16x1xf32>,
      %cst_13 = arith.constant 0.000000e+00 : f32
      %21 = vector.broadcast %cst_13 : f32 to vector<16x1xf32>
      %c0_14 = arith.constant 0 : index
      %c0_15 = arith.constant 0 : index
      %22 = vector.load %arg8[%c0_14, %c0_15] : memref<16x1xf32, #tpu.memory_space<vmem>>, vector<16x1xf32>
      tpu.vector_store %arg8[%c0_14, %c0_15], %21 {strides = array<i32>} : memref<16x1xf32, #tpu.memory_space<vmem>>, vector<16x1xf32>,
    } else {
    }
    %c0 = arith.constant 0 : index
    %c0_2 = arith.constant 0 : index
    %5 = vector.load %arg3[%c0, %c0_2] : memref<16x32xf32, #tpu.memory_space<vmem>>, vector<16x32xf32>
    %6 = arith.truncf %5 : vector<16x32xf32> to vector<16x32xbf16>
    %c0_3 = arith.constant 0 : index
    %c0_4 = arith.constant 0 : index
    %7 = vector.load %arg4[%c0_3, %c0_4] : memref<128x32xf32, #tpu.memory_space<vmem>>, vector<128x32xf32>
    %8 = arith.truncf %7 : vector<128x32xf32> to vector<128x32xbf16>
    %cst = arith.constant dense<0.000000e+00> : vector<16x128xf32>
    %9 = tpu.matmul %6, %8, %cst {dimension_numbers = #tpu.dot_dimension_numbers<[1], [1], [0], [0], [0, 0, 1, 0], [], []>} : vector<16x32xbf16>, vector<128x32xbf16>, vector<16x128xf32> -> vector<16x128xf32>
    %c0_5 = arith.constant 0 : index
    %c0_6 = arith.constant 0 : index
    %10 = vector.load %arg5[%c0_5, %c0_6] : memref<1x128xf32, #tpu.memory_space<vmem>>, vector<1x128xf32>
    %11 = vector.broadcast %10 : vector<1x128xf32> to vector<16x128xf32>
    %12 = arith.addf %9, %11 : vector<16x128xf32>
    %c0_i32_7 = arith.constant 0 : i32
    %13 = arith.cmpi eq, %arg1, %c0_i32_7 : i32
    %14 = arith.extui %13 : i1 to i32
    %c0_i32_8 = arith.constant 0 : i32
    %15 = arith.cmpi ne, %14, %c0_i32_8 : i32
    scf.if %15 {
      %c0_10 = arith.constant 0 : index
      %c0_11 = arith.constant 0 : index
      %19 = vector.load %arg7[%c0_10, %c0_11] : memref<16x1xf32, #tpu.memory_space<vmem>>, vector<16x1xf32>
      %cst_12 = arith.constant dense<0xFF800000> : vector<16xf32>
      %20 = vector.multi_reduction <maximumf>, %12, %cst_12 [1] : vector<16x128xf32> to vector<16xf32>
      %21 = vector.shape_cast %20 : vector<16xf32> to vector<16x1xf32>
      %22 = arith.maximumf %19, %21 : vector<16x1xf32>
      %c0_13 = arith.constant 0 : index
      %c0_14 = arith.constant 0 : index
      %23 = vector.load %arg8[%c0_13, %c0_14] : memref<16x1xf32, #tpu.memory_space<vmem>>, vector<16x1xf32>
      %24 = arith.subf %19, %22 : vector<16x1xf32>
      %25 = math.exp %24 : vector<16x1xf32>
      %26 = arith.mulf %23, %25 : vector<16x1xf32>
      %27 = vector.broadcast %22 : vector<16x1xf32> to vector<16x128xf32>
      %28 = arith.subf %12, %27 : vector<16x128xf32>
      %29 = math.exp %28 : vector<16x128xf32>
      %cst_15 = arith.constant dense<0.000000e+00> : vector<16xf32>
      %30 = vector.multi_reduction <add>, %29, %cst_15 [1] : vector<16x128xf32> to vector<16xf32>
      %31 = vector.shape_cast %30 : vector<16xf32> to vector<16x1xf32>
      %32 = arith.addf %26, %31 : vector<16x1xf32>
      %c0_16 = arith.constant 0 : index
      %c0_17 = arith.constant 0 : index
      %33 = vector.load %arg8[%c0_16, %c0_17] : memref<16x1xf32, #tpu.memory_space<vmem>>, vector<16x1xf32>
      tpu.vector_store %arg8[%c0_16, %c0_17], %32 {strides = array<i32>} : memref<16x1xf32, #tpu.memory_space<vmem>>, vector<16x1xf32>,
      %c0_18 = arith.constant 0 : index
      %c0_19 = arith.constant 0 : index
      %34 = vector.load %arg7[%c0_18, %c0_19] : memref<16x1xf32, #tpu.memory_space<vmem>>, vector<16x1xf32>
      tpu.vector_store %arg7[%c0_18, %c0_19], %22 {strides = array<i32>} : memref<16x1xf32, #tpu.memory_space<vmem>>, vector<16x1xf32>,
      %c0_20 = arith.constant 0 : index
      %c0_21 = arith.constant 0 : index
      %35 = vector.load %arg6[%c0_20, %c0_21] : memref<16x128xf32, #tpu.memory_space<vmem>>, vector<16x128xf32>
      tpu.vector_store %arg6[%c0_20, %c0_21], %12 {strides = array<i32>} : memref<16x128xf32, #tpu.memory_space<vmem>>, vector<16x128xf32>,
    } else {
    }
    %c1_i32 = arith.constant 1 : i32
    %16 = arith.cmpi eq, %arg1, %c1_i32 : i32
    %17 = arith.extui %16 : i1 to i32
    %c0_i32_9 = arith.constant 0 : i32
    %18 = arith.cmpi ne, %17, %c0_i32_9 : i32
    scf.if %18 {
      %c0_10 = arith.constant 0 : index
      %c0_11 = arith.constant 0 : index
      %19 = vector.load %arg7[%c0_10, %c0_11] : memref<16x1xf32, #tpu.memory_space<vmem>>, vector<16x1xf32>
      %c0_12 = arith.constant 0 : index
      %c0_13 = arith.constant 0 : index
      %20 = vector.load %arg8[%c0_12, %c0_13] : memref<16x1xf32, #tpu.memory_space<vmem>>, vector<16x1xf32>
      %21 = math.log %20 : vector<16x1xf32>
      %22 = arith.addf %19, %21 : vector<16x1xf32>
      %23 = vector.broadcast %22 : vector<16x1xf32> to vector<16x128xf32>
      %24 = arith.subf %12, %23 : vector<16x128xf32>
      %c0_14 = arith.constant 0 : index
      %c0_15 = arith.constant 0 : index
      %25 = vector.load %arg6[%c0_14, %c0_15] : memref<16x128xf32, #tpu.memory_space<vmem>>, vector<16x128xf32>
      tpu.vector_store %arg6[%c0_14, %c0_15], %24 {strides = array<i32>} : memref<16x128xf32, #tpu.memory_space<vmem>>, vector<16x128xf32>,
    } else {
    }
    return
  }
  func.func @transform_0(%arg0: i32, %arg1: i32, %arg2: i32) -> (i32, i32) {
    %c0_i32 = arith.constant 0 : i32
    %c0_i32_0 = arith.constant 0 : i32
    return %arg0, %c0_i32 : i32, i32
  }
  func.func @transform_1(%arg0: i32, %arg1: i32, %arg2: i32) -> (i32, i32) {
    %c0_i32 = arith.constant 0 : i32
    %c0_i32_0 = arith.constant 0 : i32
    return %arg2, %c0_i32 : i32, i32
  }
  func.func @transform_2(%arg0: i32, %arg1: i32, %arg2: i32) -> (i32, i32) {
    %c0_i32 = arith.constant 0 : i32
    %c0_i32_0 = arith.constant 0 : i32
    return %c0_i32, %arg2 : i32, i32
  }
  func.func @transform_3(%arg0: i32, %arg1: i32, %arg2: i32) -> (i32, i32) {
    %c0_i32 = arith.constant 0 : i32
    return %arg0, %arg2 : i32, i32
  }
}

</mosaic_0001>

<llo_original>
// kernel: projection_layer.1
$region0: #{projection_layer.1}
  #allocation0 [shape = 'u32[]', space=smem, size = 0x4, offset = 0x4, fixed_abs, tag = 'smem constant byte address 0x4 - core index']
  #allocation1 [shape = 'u32[72,128]{1,0:T(1,128)}', space=vmem, size = 0x9000, scoped, tag = 'internal scratch']
  #allocation2 [shape = 'f32[16,1]{1,0:T(8,128)}', space=vmem, size = 0x2000, scoped, tag = 'scratch operand']
  #allocation3 [shape = 'f32[16,1]{1,0:T(8,128)}', space=vmem, size = 0x2000, scoped, tag = 'scratch operand']
  %s0 = inlined_call_operand.vmem [shape: f32[16,32], index: 0, kind: input, shape index: {}]
  %s1 = inlined_call_operand.vmem [shape: f32[128,32], index: 1, kind: input, shape index: {}]
  %s2 = inlined_call_operand.vmem [shape: f32[1,128], index: 2, kind: input, shape index: {}]
  %s3 = inlined_call_operand.hbm [shape: f32[16,128], index: 3, kind: output, shape index: {}]
  %s4 = sld [smem:[#allocation0]]
  $region57: #{projection_layer.1} parent=0
    _
  %s6 = ssub.s32 1, %s4
  %s7 = scalar_select 0, %s6, %s4
  $region1: #{projection_layer.1} parent=0
    #allocation4 [shape = 'u8[8192]{0}', space=vmem, size = 0x2000, scoped, tag = 'output window, operand 0, single buffered']
    #allocation5 [shape = 's32[2]{0}', space=sflag, size = 0x8, scoped, tag = 'scoped memory for projection_layer.1']
    %8 = vsyncpa [#allocation5], 0
    loop: start=0, step=1, limit=4
    $region2: #{projection_layer.1} parent=1 // loop_pre_header
      _
    $region3: #{projection_layer.1} parent=1 // loop_header
      %s10 = sphi 0, %s14
      %p11 = scmp.ge.s32.totalorder %s10, 4
      %s17 = sphi 0, %s36
      %s18 = sphi 0, %s32
      %s19 = sphi 0, %s28
      %s20 = sphi 0, %s17
      %s21 = sphi 0, %s18
      %s22 = sphi 0, %s19
      %s23 = sphi 0, %s20
      %s24 = sphi 0, %s21
      %s25 = sphi 0, %s22
      %s39 = sphi 0, %s41
      %s42 = sphi 0, %s39
      %s43 = sphi 0, %s42
      %s59 = sphi 0, %s43
      %s65 = sphi 0, %s67
      %s68 = sphi 0, %s65
      %s69 = sphi 0, %s68
      %s85 = sphi 0, %s69
      %s91 = sphi 0, %s93
      %s94 = sphi 0, %s91
      %s95 = sphi 0, %s94
      %s111 = sphi 0, %s95
      %s119 = sphi 0, %s121
      %s122 = sphi 0, %s119
      %s123 = sphi 0, %s122
      %s139 = sphi 0, %s123
    $region4: #{projection_layer.1} parent=1 // loop_header_branch
      %13 = sbr.rel (%p11) target = $region8
    $region5: #{projection_layer.1} parent=1 // loop_body
      %s15 = ssub.s32 %s10, 1
      %s16 = ssub.s32 %s10, 2
      %s26 = sadd.s32 1, %s19
      %p27 = scmp.ge.s32.totalorder %s26, 1
      %s28 = scalar_select %p27, 0, %s26
      %s29 = sadd.s32 1, %s18
      %s30 = scalar_select %p27, %s29, %s18
      %p31 = scmp.ge.s32.totalorder %s30, 2
      %s32 = scalar_select %p31, 0, %s30
      %s33 = sadd.s32 1, %s17
      %s34 = scalar_select %p31, %s33, %s17
      %p35 = scmp.ge.s32.totalorder %s34, 1
      %s36 = scalar_select %p35, 0, %s34
      %s37 = ssub.s32 %s17, %s36
      %p38 = scmp.eq.s32.totalorder %s37, 0
      %s40 = sadd.s32 %s39, 1
      %s41 = scalar_select %p38, %s39, %s40
      %p44 = pneg %p38
      %p45 = scmp.eq.s32.totalorder %s10, 1
      %p46 = por %p44, %p45
      %p47 = scmp.ne.s32.totalorder %s39, %s42
      %p48 = scmp.eq.s32.totalorder %s10, 0
      %p49 = por %p47, %p48
      %p50 = scmp.ne.s32.totalorder %s39, %s42
      %p51 = scmp.eq.s32.totalorder %s15, 1
      %p52 = por %p50, %p51
      %p53 = scmp.ne.s32.totalorder %s42, %s43
      %p54 = scmp.eq.s32.totalorder %s15, 0
      %p55 = por %p53, %p54
      %p56 = scmp.ne.s32.totalorder %s42, %s43
      %p57 = scmp.eq.s32.totalorder %s16, 1
      %p58 = por %p56, %p57
      %p60 = scmp.ne.s32.totalorder %s43, %s59
      %p61 = scmp.eq.s32.totalorder %s16, 0
      %p62 = por %p60, %p61
      %s63 = ssub.s32 %s19, %s28
      %p64 = scmp.eq.s32.totalorder %s63, 0
      %s66 = sadd.s32 %s65, 1
      %s67 = scalar_select %p64, %s65, %s66
      %p70 = pneg %p64
      %p71 = scmp.eq.s32.totalorder %s10, 1
      %p72 = por %p70, %p71
      %p73 = scmp.ne.s32.totalorder %s65, %s68
      %p74 = scmp.eq.s32.totalorder %s10, 0
      %p75 = por %p73, %p74
      %p76 = scmp.ne.s32.totalorder %s65, %s68
      %p77 = scmp.eq.s32.totalorder %s15, 1
      %p78 = por %p76, %p77
      %p79 = scmp.ne.s32.totalorder %s68, %s69
      %p80 = scmp.eq.s32.totalorder %s15, 0
      %p81 = por %p79, %p80
      %p82 = scmp.ne.s32.totalorder %s68, %s69
      %p83 = scmp.eq.s32.totalorder %s16, 1
      %p84 = por %p82, %p83
      %p86 = scmp.ne.s32.totalorder %s69, %s85
      %p87 = scmp.eq.s32.totalorder %s16, 0
      %p88 = por %p86, %p87
      %s89 = ssub.s32 %s19, %s28
      %p90 = scmp.eq.s32.totalorder %s89, 0
      %s92 = sadd.s32 %s91, 1
      %s93 = scalar_select %p90, %s91, %s92
      %p96 = pneg %p90
      %p97 = scmp.eq.s32.totalorder %s10, 1
      %p98 = por %p96, %p97
      %p99 = scmp.ne.s32.totalorder %s91, %s94
      %p100 = scmp.eq.s32.totalorder %s10, 0
      %p101 = por %p99, %p100
      %p102 = scmp.ne.s32.totalorder %s91, %s94
      %p103 = scmp.eq.s32.totalorder %s15, 1
      %p104 = por %p102, %p103
      %p105 = scmp.ne.s32.totalorder %s94, %s95
      %p106 = scmp.eq.s32.totalorder %s15, 0
      %p107 = por %p105, %p106
      %p108 = scmp.ne.s32.totalorder %s94, %s95
      %p109 = scmp.eq.s32.totalorder %s16, 1
      %p110 = por %p108, %p109
      %p112 = scmp.ne.s32.totalorder %s95, %s111
      %p113 = scmp.eq.s32.totalorder %s16, 0
      %p114 = por %p112, %p113
      %s115 = ssub.s32 %s17, %s36
      %s116 = ssub.s32 %s19, %s28
      %s117 = sor.u32 %s115, %s116
      %p118 = scmp.eq.s32.totalorder %s117, 0
      %s120 = sadd.s32 %s119, 1
      %s121 = scalar_select %p118, %s119, %s120
      %p124 = pneg %p118
      %p125 = scmp.eq.s32.totalorder %s10, 1
      %p126 = por %p124, %p125
      %p127 = scmp.ne.s32.totalorder %s119, %s122
      %p128 = scmp.eq.s32.totalorder %s10, 0
      %p129 = por %p127, %p128
      %p130 = scmp.ne.s32.totalorder %s119, %s122
      %p131 = scmp.eq.s32.totalorder %s15, 1
      %p132 = por %p130, %p131
      %p133 = scmp.ne.s32.totalorder %s122, %s123
      %p134 = scmp.eq.s32.totalorder %s15, 0
      %p135 = por %p133, %p134
      %p136 = scmp.ne.s32.totalorder %s122, %s123
      %p137 = scmp.eq.s32.totalorder %s16, 1
      %p138 = por %p136, %p137
      %p140 = scmp.ne.s32.totalorder %s123, %s139
      %p141 = scmp.eq.s32.totalorder %s16, 0
      %p142 = por %p140, %p141
      %p143 = scmp.le.s32.totalorder 1, %s10
      %p144 = scmp.lt.s32.totalorder %s10, 3
      %p145 = pnand %p143, %p144
      %p146 = pneg %p145
      // Predicated region
      $region9: #{projection_layer.1} parent=5 // pred_check
        _
      $region10: #{projection_layer.1} parent=5 // pred_check_branch
        %148 = sbr.rel (%p145) target = $region12
      $region11: #{projection_layer.1} parent=5 // pred_region
        %s149 = ssub.s32 %s10, 1
        // Predicated region
        $region13: #{projection_layer.1} parent=11 // pred_check
          %p150 = pneg %p55
        $region14: #{projection_layer.1} parent=11 // pred_check_branch
          %152 = sbr.rel (%p150) target = $region16
        $region15: #{projection_layer.1} parent=11 // pred_region
          %s153 = smul.u32 2, %s20
          %p154 = scmp.lt.s32.totalorder %s153, 1
          %s155 = scalar_select %p154, %s153, 1
          %s156 = smul.addr %s155, 8
          %s157 = scalar_lea.vmem %s0, %s156
          %s158 = smul.u32 2, %s20
        $region16: #{projection_layer.1} parent=11 // pred_fallthru
          _
        // Predicated region
        $region17: #{projection_layer.1} parent=11 // pred_check
          %p159 = pneg %p81
        $region18: #{projection_layer.1} parent=11 // pred_check_branch
          %161 = sbr.rel (%p159) target = $region20
        $region19: #{projection_layer.1} parent=11 // pred_region
          %s162 = smul.u32 16, %s22
          %p163 = scmp.lt.s32.totalorder %s162, 15
          %s164 = scalar_select %p163, %s162, 15
          %s165 = smul.addr %s164, 8
          %s166 = scalar_lea.vmem %s1, %s165
          %s167 = smul.u32 16, %s22
        $region20: #{projection_layer.1} parent=11 // pred_fallthru
          _
        // Predicated region
        $region21: #{projection_layer.1} parent=11 // pred_check
          %p168 = pneg %p107
        $region22: #{projection_layer.1} parent=11 // pred_check_branch
          %170 = sbr.rel (%p168) target = $region24
        $region23: #{projection_layer.1} parent=11 // pred_region
          %p171 = scmp.lt.s32.totalorder %s22, 0
          %s172 = scalar_select %p171, %s22, 0
          %s173 = scalar_lea.vmem %s2, %s172
        $region24: #{projection_layer.1} parent=11 // pred_fallthru
          _
      $region12: #{projection_layer.1} parent=5 // pred_fallthru
        _
      %p174 = scmp.lt.s32.totalorder %s10, 2
      // Predicated region
      $region25: #{projection_layer.1} parent=5 // pred_check
        %p175 = pneg %p174
      $region26: #{projection_layer.1} parent=5 // pred_check_branch
        %177 = sbr.rel (%p175) target = $region28
      $region27: #{projection_layer.1} parent=5 // pred_region
        _
      $region28: #{projection_layer.1} parent=5 // pred_fallthru
        _
      %p178 = scmp.le.s32.totalorder 1, %s10
      %p179 = scmp.lt.s32.totalorder %s10, 3
      %p180 = pnand %p178, %p179
      %p181 = pneg %p180
      // Predicated region
      $region29: #{projection_layer.1} parent=5 // pred_check
        _
      $region30: #{projection_layer.1} parent=5 // pred_check_branch
        %183 = sbr.rel (%p180) target = $region32
      $region31: #{projection_layer.1} parent=5 // pred_region
        %s184 = ssub.s32 %s10, 1
        %s185 = smul.u32 2, %s20
        %p186 = scmp.lt.s32.totalorder %s185, 1
        %s187 = scalar_select %p186, %s185, 1
        %s188 = smul.addr %s187, 8
        %s189 = scalar_lea.vmem %s0, %s188
        %p190 = pneg %p55
        %p191 = pneg %p52
        %s192 = smul.u32 16, %s22
        %p193 = scmp.lt.s32.totalorder %s192, 15
        %s194 = scalar_select %p193, %s192, 15
        %s195 = smul.addr %s194, 8
        %s196 = scalar_lea.vmem %s1, %s195
        %p197 = pneg %p81
        %p198 = pneg %p78
        %p199 = scmp.lt.s32.totalorder %s22, 0
        %s200 = scalar_select %p199, %s22, 0
        %s201 = scalar_lea.vmem %s2, %s200
        %p202 = pneg %p107
        %p203 = pneg %p104
        %p204 = pneg %p135
        %p205 = pneg %p132
        %s206 = smul.u32 2, %s20
        %p207 = scmp.lt.s32.totalorder %s206, 1
        %s208 = scalar_select %p207, %s206, 1
        %s209 = smul.addr %s208, 8
        %s210 = scalar_lea.vmem %s0, %s209
        %s211 = smul.u32 2, %s20
        %s212 = smul.u32 16, %s22
        %p213 = scmp.lt.s32.totalorder %s212, 15
        %s214 = scalar_select %p213, %s212, 15
        %s215 = smul.addr %s214, 8
        %s216 = scalar_lea.vmem %s1, %s215
        %s217 = smul.u32 16, %s22
        %p218 = scmp.lt.s32.totalorder %s22, 0
        %s219 = scalar_select %p218, %s22, 0
        %s220 = scalar_lea.vmem %s2, %s219
        %s221 = smul.u32 2, %s20
        %p222 = scmp.eq.s32.totalorder %s21, 0
        %p223 = scmp.eq.s32.totalorder %s22, 0
        %p224 = pnand %p222, %p223
        %p225 = pneg %p224
        // Predicated region
        $region33: #{projection_layer.1} parent=31 // pred_check
          _
        $region34: #{projection_layer.1} parent=31 // pred_check_branch
          %227 = sbr.rel (%p224) target = $region36
        $region35: #{projection_layer.1} parent=31 // pred_region
          %vm228 = vcmask 7168
          %229 = vst.msk [vmem:[#allocation2] sm:$0xff] %vm228, -inf
          %230 = vst.msk [vmem:[#allocation2 + $0x8] sm:$0xff] %vm228, -inf
          %231 = vst.msk [vmem:[#allocation3] sm:$0xff] %vm228, 0.0
          %232 = vst.msk [vmem:[#allocation3 + $0x8] sm:$0xff] %vm228, 0.0
        $region36: #{projection_layer.1} parent=31 // pred_fallthru
          _
        %v233 = vld [vmem:[%s210] sm:$0xff]
        %v234 = vld [vmem:[%s210 + $0x8] sm:$0xff]
        %v235 = vpack.c.bf16 %v234, %v233
        %v236 = vld [vmem:[%s216] sm:$0xff]
        %v237 = vld [vmem:[%s216 + $0x8] sm:$0xff]
        %v238 = vld [vmem:[%s216 + $0x10] sm:$0xff]
        %v239 = vld [vmem:[%s216 + $0x18] sm:$0xff]
        %v240 = vld [vmem:[%s216 + $0x20] sm:$0xff]
        %v241 = vld [vmem:[%s216 + $0x28] sm:$0xff]
        %v242 = vld [vmem:[%s216 + $0x30] sm:$0xff]
        %v243 = vld [vmem:[%s216 + $0x38] sm:$0xff]
        %v244 = vld [vmem:[%s216 + $0x40] sm:$0xff]
        %v245 = vld [vmem:[%s216 + $0x48] sm:$0xff]
        %v246 = vld [vmem:[%s216 + $0x50] sm:$0xff]
        %v247 = vld [vmem:[%s216 + $0x58] sm:$0xff]
        %v248 = vld [vmem:[%s216 + $0x60] sm:$0xff]
        %v249 = vld [vmem:[%s216 + $0x68] sm:$0xff]
        %v250 = vld [vmem:[%s216 + $0x70] sm:$0xff]
        %v251 = vld [vmem:[%s216 + $0x78] sm:$0xff]
        %v252 = vpack.c.bf16 %v237, %v236
        %v253 = vpack.c.bf16 %v239, %v238
        %v254 = vpack.c.bf16 %v241, %v240
        %v255 = vpack.c.bf16 %v243, %v242
        %v256 = vpack.c.bf16 %v245, %v244
        %v257 = vpack.c.bf16 %v247, %v246
        %v258 = vpack.c.bf16 %v249, %v248
        %v259 = vpack.c.bf16 %v251, %v250
        %v260 = vld [vmem:[%s220] sm:$0x1]
        %v262 = vperm.slane %v260, 0
        %vm264 = vcmask 261120
        %v266 = vsel %vm264, %v235, 0
        %v269 = vsel %vm264, %v252, 0
        %v272 = vsel %vm264, %v253, 0
        %v275 = vsel %vm264, %v254, 0
        %v278 = vsel %vm264, %v255, 0
        %v281 = vsel %vm264, %v256, 0
        %v284 = vsel %vm264, %v257, 0
        %v287 = vsel %vm264, %v258, 0
        %v290 = vsel %vm264, %v259, 0
        %292 = vmatpush.bf16.xpose.msra.mxu0 %v290
        %293 = vmatpush.bf16.xpose.msra.mxu0 %v287
        %294 = vmatpush.bf16.xpose.msra.mxu0 %v284
        %295 = vmatpush.bf16.xpose.msra.mxu0 %v281
        %296 = vmatpush.bf16.xpose.msra.mxu0 %v278
        %297 = vmatpush.bf16.xpose.msra.mxu0 %v275
        %298 = vmatpush.bf16.xpose.msra.mxu0 %v272
        %299 = vmatpush.bf16.xpose.msra.mxu0 %v269
        %300 = vmatmul.bf16.gmra.mxu0 %v266
        %v301 = vpop.f32.mrf.mxu0
        %v302 = vadd.f32 %v262, %v301
        %v303 = vpop.f32.mrf.mxu0
        %v304 = vadd.f32 %v262, %v303
        %305 = vdwg.mxu0
        // Predicated region
        $region37: #{projection_layer.1} parent=31 // pred_check
          %p306 = pneg %p222
        $region38: #{projection_layer.1} parent=31 // pred_check_branch
          %308 = sbr.rel (%p306) target = $region40
        $region39: #{projection_layer.1} parent=31 // pred_region
          %v309 = vld [vmem:[#allocation2] sm:$0xff]
          %v310 = vld [vmem:[#allocation2 + $0x8] sm:$0xff]
          %311 = vmax.xlane.f32.xlu0 %v302
          %v312 = vpop.xlane.xlu0 %311
          %313 = vmax.xlane.f32.xlu0 %v304
          %v314 = vpop.xlane.xlu0 %313
          %v315 = vmax.f32 %v309, %v312
          %v316 = vmax.f32 %v310, %v314
          %v317 = vld [vmem:[#allocation3] sm:$0xff]
          %v318 = vld [vmem:[#allocation3 + $0x8] sm:$0xff]
          %v319 = vsub.f32 %v309, %v315
          %v320 = vsub.f32 %v310, %v316
          %v321 = vmul.f32 %v319, 1.442695
          %v322 = vpow.pop %v321
          %v323 = vmul.f32 %v320, 1.442695
          %v324 = vpow.pop %v323
          %v325 = vmul.f32 %v317, %v322
          %v326 = vmul.f32 %v318, %v324
          %328 = vset.pattern.permute.xlu0 0
          %329 = vperm.xlu0 %328, %v315
          %v330 = vpop.permute.xlu0 %329
          %333 = vset.pattern.permute.xlu0 0
          %334 = vperm.xlu0 %333, %v316
          %v335 = vpop.permute.xlu0 %334
          %v337 = vsub.f32 %v302, %v330
          %v338 = vsub.f32 %v304, %v335
          %v339 = vmul.f32 %v337, 1.442695
          %v340 = vpow.pop %v339
          %v341 = vmul.f32 %v338, 1.442695
          %v342 = vpow.pop %v341
          %343 = vadd.xlane.f32.xlu0 %v340
          %v344 = vpop.xlane.xlu0 %343
          %345 = vadd.xlane.f32.xlu0 %v342
          %v346 = vpop.xlane.xlu0 %345
          %v347 = vadd.f32 %v325, %v344
          %v348 = vadd.f32 %v326, %v346
          %vm349 = vcmask 7168
          %350 = vst.msk [vmem:[#allocation3] sm:$0xff] %vm349, %v347
          %351 = vst.msk [vmem:[#allocation3 + $0x8] sm:$0xff] %vm349, %v348
          %352 = vst.msk [vmem:[#allocation2] sm:$0xff] %vm349, %v315
          %353 = vst.msk [vmem:[#allocation2 + $0x8] sm:$0xff] %vm349, %v316
          %354 = vst [vmem:[#allocation4] sm:$0xff] %v302
          %355 = vst [vmem:[#allocation4 + $0x8] sm:$0xff] %v304
        $region40: #{projection_layer.1} parent=31 // pred_fallthru
          _
        %p356 = scmp.eq.s32.totalorder %s21, 1
        // Predicated region
        $region41: #{projection_layer.1} parent=31 // pred_check
          %p357 = pneg %p356
        $region42: #{projection_layer.1} parent=31 // pred_check_branch
          %359 = sbr.rel (%p357) target = $region44
        $region43: #{projection_layer.1} parent=31 // pred_region
          %v360 = vld [vmem:[#allocation2] sm:$0xff]
          %v361 = vld [vmem:[#allocation2 + $0x8] sm:$0xff]
          %v362 = vld [vmem:[#allocation3] sm:$0xff]
          %v363 = vld [vmem:[#allocation3 + $0x8] sm:$0xff]
          %v364 = vlog2.pop %v362
          %v365 = vmul.f32 %v364, 0.6931472
          %v366 = vlog2.pop %v363
          %v367 = vmul.f32 %v366, 0.6931472
          %v368 = vadd.f32 %v360, %v365
          %v369 = vadd.f32 %v361, %v367
          %371 = vset.pattern.permute.xlu0 0
          %372 = vperm.xlu0 %371, %v368
          %v373 = vpop.permute.xlu0 %372
          %376 = vset.pattern.permute.xlu0 0
          %377 = vperm.xlu0 %376, %v369
          %v378 = vpop.permute.xlu0 %377
          %v380 = vsub.f32 %v302, %v373
          %v381 = vsub.f32 %v304, %v378
          %382 = vst [vmem:[#allocation4] sm:$0xff] %v380
          %383 = vst [vmem:[#allocation4 + $0x8] sm:$0xff] %v381
        $region44: #{projection_layer.1} parent=31 // pred_fallthru
          _
        // Predicated region
        $region45: #{projection_layer.1} parent=31 // pred_check
          %p384 = pneg %p132
        $region46: #{projection_layer.1} parent=31 // pred_check_branch
          %386 = sbr.rel (%p384) target = $region48
        $region47: #{projection_layer.1} parent=31 // pred_region
          %s387 = smul.u32 2, %s20
          %389 = vsyncadd [#allocation5], 0
          %s390 = sadd.s32 %s22, %s387
          %s391 = smul.addr %s390, 8
          %s392 = scalar_lea.hbm %s3, %s391
          %s393 = sshll.u32 [#allocation4], 4
          %s394 = int_to_ptr.vmem [resolvable:$true] %s393
          %s395 = sshll.u32 %s392, 4
          %s396 = int_to_ptr.hbm [resolvable:$true] %s395
          %401 = dma.vmem_to_hbm [thread:$0]  %s394, 256, %s396, [#allocation5], 128, 128, 8
        $region48: #{projection_layer.1} parent=31 // pred_fallthru
          _
        // Predicated region
        $region49: #{projection_layer.1} parent=31 // pred_check
          %p402 = pneg %p132
        $region50: #{projection_layer.1} parent=31 // pred_check_branch
          %404 = sbr.rel (%p402) target = $region52
        $region51: #{projection_layer.1} parent=31 // pred_region
          %406 = dma.done [#allocation5], 256
        $region52: #{projection_layer.1} parent=31 // pred_fallthru
          _
      $region32: #{projection_layer.1} parent=5 // pred_fallthru
        _
      %p407 = scmp.le.s32.totalorder 2, %s10
      // Predicated region
      $region53: #{projection_layer.1} parent=5 // pred_check
        %p408 = pneg %p407
      $region54: #{projection_layer.1} parent=5 // pred_check_branch
        %410 = sbr.rel (%p408) target = $region56
      $region55: #{projection_layer.1} parent=5 // pred_region
        %s411 = ssub.s32 %s10, 2
      $region56: #{projection_layer.1} parent=5 // pred_fallthru
        _
    $region6: #{projection_layer.1} parent=1 // loop_footer
      %s14 = sadd.s32 1, %s10
    $region7: #{projection_layer.1} parent=1 // loop_footer_branch
      %9 = sbr.rel target = $region3
    $region8: #{projection_layer.1} parent=1 // loop_exit
      _
    %412 = vsyncpa [#allocation5], 1
    %s413 = scalar_lea.sflag [#allocation5], 1
    %414 = vsyncpa %s413, 1

</llo_original>
